<compile_context>
chip_gen: v5e
topology: v5e:2x2
jax: 0.10.0
libtpu: 0.0.40
codegen_flags: <defaults>
</compile_context>

<pallas_src>
import functools

import jax
import jax.numpy as jnp
from jax.experimental import pallas as pl
from jax.experimental.pallas import tpu as pltpu


def _flow_decoder_kernel(fb_ref, wu_ref,                    # SMEM flow scalars (K,)
                         z0_ref, p_ref,                     # batch-tiled activations
                         w_ref, uhat_ref,                   # flow vectors (K, L)
                         w1z_ref, w1p_ref, b1_ref,          # split first layer
                         w2_ref, b2_ref, wo_ref, bo_ref,    # remaining MLP
                         s_ref, ld_ref,                     # outputs
                         *, num_flows, mxu_dtype):
    f32 = jnp.float32
    z = z0_ref[...].astype(f32)                             # (TB, L)
    p = p_ref[...]

    # The P-dependent half of the first layer does not depend on z, so its MXU
    # work is issued before the serial planar-flow chain and overlaps with it.
    h_p = jnp.dot(p.astype(mxu_dtype), w1p_ref[...],
                  preferred_element_type=f32) + b1_ref[...]          # (TB, H1)

    # --- planar flows (K is small -> static unroll) ---
    # Accumulate the Jacobian factors as a running product; one log/abs at the
    # end instead of K EUP log calls in the serial chain.
    prod = jnp.ones((z.shape[0], 1), f32)
    for k in range(num_flows):
        wk = w_ref[k, :]                                    # (L,)  VMEM
        uk = uhat_ref[k, :]                                 # (L,)  VMEM
        bk = fb_ref[k]                                      # SMEM scalar b_k
        wuk = wu_ref[k]                                     # SMEM scalar w_k . u_hat_k
        lin = jnp.sum(z * wk[None, :], axis=-1, keepdims=True) + bk  # (TB, 1)
        t = jnp.tanh(lin)
        z = z + uk[None, :] * t
        prod = prod * (1.0 + (1.0 - t * t) * wuk)
    logdet = jnp.log(jnp.abs(prod) + 1e-8)                  # (TB, 1)

    # --- conditional decoder MLP (concat avoided via split W1) ---
    h1 = jnp.tanh(jnp.dot(z.astype(mxu_dtype), w1z_ref[...],
                          preferred_element_type=f32) + h_p)
    # nn.Dropout is identity at inference time
    h2 = jnp.tanh(jnp.dot(h1.astype(mxu_dtype), w2_ref[...],
                          preferred_element_type=f32) + b2_ref[...])
    s_ref[...] = (jnp.dot(h2.astype(mxu_dtype), wo_ref[...],
                          preferred_element_type=f32) + bo_ref[...]
                  ).astype(s_ref.dtype)
    # lane-dense log-det output slab; wrapper slices column 0.
    ld_ref[...] = jnp.broadcast_to(logdet, ld_ref.shape)


def flow_decoder(z0, P, params, *, num_flows, batch_tile=256,
                 mxu_dtype=jnp.bfloat16):
    B, L = z0.shape
    Pd = P.shape[1]
    H1 = params["W1"].shape[1]
    H2 = params["W2"].shape[1]
    S_dim = params["Wo"].shape[1]
    K = num_flows
    assert params["W1"].shape[0] == L + Pd

    # ---- parameter-only glue stays in plain JAX ----
    u, w = params["flow_u"], params["flow_w"]
    wu = jnp.sum(w * u, axis=-1, keepdims=True)             # (K, 1)
    m = -1.0 + jax.nn.softplus(wu)
    u_hat = u + (m - wu) * w / (jnp.sum(w * w, axis=-1, keepdims=True) + 1e-8)
    wu_hat = jnp.sum(w * u_hat, axis=-1)                    # (K,)  -> SMEM
    flow_b = params["flow_b"].reshape(-1)                   # (K,)  -> SMEM

    # Split first layer so the kernel never has to concat([z, P]).
    W1z = params["W1"][:L].astype(mxu_dtype)                # (L, H1)
    W1p = params["W1"][L:].astype(mxu_dtype)                # (Pd, H1)
    W2 = params["W2"].astype(mxu_dtype)
    Wo = params["Wo"].astype(mxu_dtype)

    # Batch tile: whole batch if small, else 256 rows (multiple of 8 sublanes,
    # fills a 256x256 MXU on v6e/v7x, well within v7x's 64 MiB VMEM).
    TB = B if B <= batch_tile else batch_tile
    grid = (pl.cdiv(B, TB),)

    def vmem_const(shape):
        return pl.BlockSpec(shape, lambda i: (0, 0))

    def vmem_batch(feat):
        return pl.BlockSpec((TB, feat), lambda i: (i, 0))

    smem = pl.BlockSpec(memory_space=pltpu.MemorySpace.SMEM)

    in_specs = [
        smem, smem,                                          # flow_b, w.u_hat
        vmem_batch(L), vmem_batch(Pd),                       # z0, P (batch-tiled)
        vmem_const((K, L)), vmem_const((K, L)),              # flow_w, u_hat
        vmem_const((L, H1)), vmem_const((Pd, H1)), vmem_const((1, H1)),
        vmem_const((H1, H2)), vmem_const((1, H2)),
        vmem_const((H2, S_dim)), vmem_const((1, S_dim)),
    ]
    out_specs = (vmem_batch(S_dim), vmem_batch(128))

    # Cost hint for XLA's scheduler around the custom call.
    gemm_flops = 2 * B * (L * H1 + Pd * H1 + H1 * H2 + H2 * S_dim)
    flow_flops = B * K * (4 * L + 10)
    transcendentals = B * (K + H1 + H2 + 1)
    w_bytes = (2 * (L * H1 + Pd * H1 + H1 * H2 + H2 * S_dim)   # bf16 weights
               + 4 * (H1 + H2 + S_dim)                         # f32 biases
               + 4 * 2 * K * L + 4 * 2 * K)                    # flow params
    bytes_accessed = 4 * B * (L + Pd + S_dim + 128) + w_bytes
    cost = pl.CostEstimate(flops=gemm_flops + flow_flops,
                           transcendentals=transcendentals,
                           bytes_accessed=bytes_accessed)

    # Explicit VMEM budget (generation-safe: capped below v7x's 64 MiB).
    tile_bytes = 2 * TB * (L + Pd + S_dim + 128) * 4           # double-buffered tiles
    scratch_bytes = 4 * TB * (H1 + H2 + S_dim) * 4             # activation headroom
    vmem_limit = int(min(48 * 2**20,
                         max(32 * 2**20, 4 * (tile_bytes + scratch_bytes + w_bytes))))

    kernel = functools.partial(_flow_decoder_kernel,
                               num_flows=num_flows, mxu_dtype=mxu_dtype)

    S_hat, ld_slab = pl.pallas_call(
        kernel,
        grid=grid,
        out_shape=(
            jax.ShapeDtypeStruct((B, S_dim), jnp.float32),
            jax.ShapeDtypeStruct((B, 128), jnp.float32),
        ),
        in_specs=in_specs,
        out_specs=out_specs,
        compiler_params=pltpu.CompilerParams(
            dimension_semantics=("parallel",),
            vmem_limit_bytes=vmem_limit,
        ),
        cost_estimate=cost,
    )(flow_b, wu_hat, z0, P, params["flow_w"], u_hat,
      W1z, W1p, params["b1"], W2, params["b2"], Wo, params["bo"])

    return S_hat, ld_slab[:, 0]


def flow_decoder_ref(z0, P, params, *, num_flows):
    """Pure-JAX f32 reference matching the PyTorch forward."""
    u, w = params["flow_u"], params["flow_w"]
    wu = jnp.sum(w * u, axis=-1, keepdims=True)
    m = -1.0 + jax.nn.softplus(wu)
    u_hat = u + (m - wu) * w / (jnp.sum(w * w, axis=-1, keepdims=True) + 1e-8)
    z = z0
    logdet = jnp.zeros((z0.shape[0],), jnp.float32)
    for k in range(num_flows):
        lin = z @ w[k] + params["flow_b"][k, 0]
        t = jnp.tanh(lin)
        z = z + u_hat[k][None, :] * t[:, None]
        wuh = jnp.sum(w[k] * u_hat[k])
        logdet = logdet + jnp.log(jnp.abs(1.0 + (1.0 - t * t) * wuh) + 1e-8)
    x = jnp.concatenate([z, P], axis=1)
    h = jnp.tanh(x @ params["W1"] + params["b1"])
    h = jnp.tanh(h @ params["W2"] + params["b2"])
    S = h @ params["Wo"] + params["bo"]
    return S, logdet


def init_params(key, latent_dim, P_dim, S_dim, hidden_dims, num_flows):
    ks = jax.random.split(key, 8)
    p = {}
    # planar flow params (one (1, L) u, (1, L) w, scalar b per flow -> stacked)
    p["flow_u"] = 0.1 * jax.random.normal(ks[0], (num_flows, latent_dim), jnp.float32)
    p["flow_w"] = 0.1 * jax.random.normal(ks[1], (num_flows, latent_dim), jnp.float32)
    p["flow_b"] = 0.1 * jax.random.normal(ks[2], (num_flows, 1), jnp.float32)

    # decoder MLP (PyTorch default init: U(-1/sqrt(fan_in), 1/sqrt(fan_in)))
    def linear(k, fan_in, fan_out):
        lim = 1.0 / jnp.sqrt(fan_in)
        kw, kb = jax.random.split(k)
        W = jax.random.uniform(kw, (fan_in, fan_out), jnp.float32, -lim, lim)
        b = jax.random.uniform(kb, (1, fan_out), jnp.float32, -lim, lim)
        return W, b

    in_dim = latent_dim + P_dim
    p["W1"], p["b1"] = linear(ks[3], in_dim, hidden_dims[0])
    p["W2"], p["b2"] = linear(ks[4], hidden_dims[0], hidden_dims[1])
    p["Wo"], p["bo"] = linear(ks[5], hidden_dims[1], S_dim)
    return p


if __name__ == "__main__":
    B, latent_dim, P_dim, S_dim = 8, 16, 16, 128
    hidden_dims = (64, 64)
    num_flows = 4

    key = jax.random.PRNGKey(0)
    k_z, k_p, k_params = jax.random.split(key, 3)
    z0 = jax.random.normal(k_z, (B, latent_dim), jnp.float32)
    P = jax.random.normal(k_p, (B, P_dim), jnp.float32)
    params = init_params(k_params, latent_dim, P_dim, S_dim, hidden_dims, num_flows)

    fn = jax.jit(functools.partial(flow_decoder, num_flows=num_flows))
    S_hat, log_det_sum = fn(z0, P, params)
    jax.block_until_ready((S_hat, log_det_sum))

    assert S_hat.shape == (B, S_dim) and log_det_sum.shape == (B,)
    assert bool(jnp.all(jnp.isfinite(S_hat))) and bool(jnp.all(jnp.isfinite(log_det_sum)))

    # sanity check against pure-JAX f32 reference (loose tol: bf16 MXU operands)
    S_ref, ld_ref = flow_decoder_ref(z0, P, params, num_flows=num_flows)
    assert jnp.allclose(S_hat, S_ref, atol=5e-2, rtol=5e-2), \
        float(jnp.max(jnp.abs(S_hat - S_ref)))
    assert jnp.allclose(log_det_sum, ld_ref, atol=1e-3, rtol=1e-3), \
        float(jnp.max(jnp.abs(log_det_sum - ld_ref)))

    print("KERNEL_OK")
</pallas_src>

<mosaic_0001>
module attributes {stable_mosaic.version = 11 : i64} {
  func.func @_flow_decoder_kernel(%arg0: i32, %arg1: memref<4xf32, #tpu.memory_space<smem>>, %arg2: memref<4xf32, #tpu.memory_space<smem>>, %arg3: memref<8x16xf32, #tpu.memory_space<vmem>>, %arg4: memref<8x16xf32, #tpu.memory_space<vmem>>, %arg5: memref<4x16xf32, #tpu.memory_space<vmem>>, %arg6: memref<4x16xf32, #tpu.memory_space<vmem>>, %arg7: memref<16x64xbf16, #tpu.memory_space<vmem>>, %arg8: memref<16x64xbf16, #tpu.memory_space<vmem>>, %arg9: memref<1x64xf32, #tpu.memory_space<vmem>>, %arg10: memref<64x64xbf16, #tpu.memory_space<vmem>>, %arg11: memref<1x64xf32, #tpu.memory_space<vmem>>, %arg12: memref<64x128xbf16, #tpu.memory_space<vmem>>, %arg13: memref<1x128xf32, #tpu.memory_space<vmem>>, %arg14: memref<8x128xf32, #tpu.memory_space<vmem>>, %arg15: memref<8x128xf32, #tpu.memory_space<vmem>>) attributes {dimension_semantics = [#tpu.dimension_semantics<parallel>], iteration_bounds = array<i64: 1>, scalar_prefetch = 0 : i64, scratch_operands = 0 : i64, tpu.core_type = #tpu.core_type<tc>, window_params = [{transform_indices = @transform_0, window_bounds = array<i64: 4>}, {transform_indices = @transform_1, window_bounds = array<i64: 4>}, {transform_indices = @transform_2, window_bounds = array<i64: 8, 16>}, {transform_indices = @transform_3, window_bounds = array<i64: 8, 16>}, {pipeline_mode = #tpu.pipeline_mode<synchronous>, transform_indices = @transform_4, window_bounds = array<i64: 4, 16>}, {pipeline_mode = #tpu.pipeline_mode<synchronous>, transform_indices = @transform_5, window_bounds = array<i64: 4, 16>}, {pipeline_mode = #tpu.pipeline_mode<synchronous>, transform_indices = @transform_6, window_bounds = array<i64: 16, 64>}, {pipeline_mode = #tpu.pipeline_mode<synchronous>, transform_indices = @transform_7, window_bounds = array<i64: 16, 64>}, {pipeline_mode = #tpu.pipeline_mode<synchronous>, transform_indices = @transform_8, window_bounds = array<i64: 1, 64>}, {pipeline_mode = #tpu.pipeline_mode<synchronous>, transform_indices = @transform_9, window_bounds = array<i64: 64, 64>}, {pipeline_mode = #tpu.pipeline_mode<synchronous>, transform_indices = @transform_10, window_bounds = array<i64: 1, 64>}, {pipeline_mode = #tpu.pipeline_mode<synchronous>, transform_indices = @transform_11, window_bounds = array<i64: 64, 128>}, {pipeline_mode = #tpu.pipeline_mode<synchronous>, transform_indices = @transform_12, window_bounds = array<i64: 1, 128>}, {transform_indices = @transform_13, window_bounds = array<i64: 8, 128>}, {transform_indices = @transform_14, window_bounds = array<i64: 8, 128>}]} {
    %c0 = arith.constant 0 : index
    %c0_0 = arith.constant 0 : index
    %0 = vector.load %arg3[%c0, %c0_0] : memref<8x16xf32, #tpu.memory_space<vmem>>, vector<8x16xf32>
    %c0_1 = arith.constant 0 : index
    %c0_2 = arith.constant 0 : index
    %1 = vector.load %arg4[%c0_1, %c0_2] : memref<8x16xf32, #tpu.memory_space<vmem>>, vector<8x16xf32>
    %2 = arith.truncf %1 : vector<8x16xf32> to vector<8x16xbf16>
    %c0_3 = arith.constant 0 : index
    %c0_4 = arith.constant 0 : index
    %3 = vector.load %arg8[%c0_3, %c0_4] : memref<16x64xbf16, #tpu.memory_space<vmem>>, vector<16x64xbf16>
    %cst = arith.constant dense<0.000000e+00> : vector<8x64xf32>
    %4 = tpu.matmul %2, %3, %cst {dimension_numbers = #tpu.dot_dimension_numbers<[1], [0], [0], [1], [0, 0, 1, 1], [], []>} : vector<8x16xbf16>, vector<16x64xbf16>, vector<8x64xf32> -> vector<8x64xf32>
    %c0_5 = arith.constant 0 : index
    %c0_6 = arith.constant 0 : index
    %5 = vector.load %arg9[%c0_5, %c0_6] : memref<1x64xf32, #tpu.memory_space<vmem>>, vector<1x64xf32>
    %6 = vector.broadcast %5 : vector<1x64xf32> to vector<8x64xf32>
    %7 = arith.addf %4, %6 : vector<8x64xf32>
    %cst_7 = arith.constant 1.000000e+00 : f32
    %8 = vector.broadcast %cst_7 : f32 to vector<8x1xf32>
    %c0_8 = arith.constant 0 : index
    %c0_9 = arith.constant 0 : index
    %9 = vector.load %arg5[%c0_8, %c0_9] : memref<4x16xf32, #tpu.memory_space<vmem>>, vector<1x16xf32>
    %10 = vector.shape_cast %9 : vector<1x16xf32> to vector<16xf32>
    %c0_10 = arith.constant 0 : index
    %c0_11 = arith.constant 0 : index
    %11 = vector.load %arg6[%c0_10, %c0_11] : memref<4x16xf32, #tpu.memory_space<vmem>>, vector<1x16xf32>
    %12 = vector.shape_cast %11 : vector<1x16xf32> to vector<16xf32>
    %c0_12 = arith.constant 0 : index
    %13 = memref.load %arg1[%c0_12] : memref<4xf32, #tpu.memory_space<smem>>
    %c0_13 = arith.constant 0 : index
    %14 = memref.load %arg2[%c0_13] : memref<4xf32, #tpu.memory_space<smem>>
    %15 = vector.shape_cast %10 : vector<16xf32> to vector<1x16xf32>
    %16 = vector.broadcast %15 : vector<1x16xf32> to vector<8x16xf32>
    %17 = arith.mulf %0, %16 : vector<8x16xf32>
    %cst_14 = arith.constant dense<0.000000e+00> : vector<8xf32>
    %18 = vector.multi_reduction <add>, %17, %cst_14 [1] : vector<8x16xf32> to vector<8xf32>
    %19 = vector.shape_cast %18 : vector<8xf32> to vector<8x1xf32>
    %20 = vector.broadcast %13 : f32 to vector<8x1xf32>
    %21 = arith.addf %19, %20 : vector<8x1xf32>
    %22 = math.tanh %21 : vector<8x1xf32>
    %23 = vector.shape_cast %12 : vector<16xf32> to vector<1x16xf32>
    %24 = vector.broadcast %23 : vector<1x16xf32> to vector<8x16xf32>
    %25 = vector.broadcast %22 : vector<8x1xf32> to vector<8x16xf32>
    %26 = arith.mulf %24, %25 : vector<8x16xf32>
    %27 = arith.addf %0, %26 : vector<8x16xf32>
    %28 = arith.mulf %22, %22 : vector<8x1xf32>
    %cst_15 = arith.constant 1.000000e+00 : f32
    %29 = vector.broadcast %cst_15 : f32 to vector<8x1xf32>
    %30 = arith.subf %29, %28 : vector<8x1xf32>
    %31 = vector.broadcast %14 : f32 to vector<8x1xf32>
    %32 = arith.mulf %30, %31 : vector<8x1xf32>
    %cst_16 = arith.constant 1.000000e+00 : f32
    %33 = vector.broadcast %cst_16 : f32 to vector<8x1xf32>
    %34 = arith.addf %33, %32 : vector<8x1xf32>
    %35 = arith.mulf %8, %34 : vector<8x1xf32>
    %c1 = arith.constant 1 : index
    %c0_17 = arith.constant 0 : index
    %36 = vector.load %arg5[%c1, %c0_17] : memref<4x16xf32, #tpu.memory_space<vmem>>, vector<1x16xf32>
    %37 = vector.shape_cast %36 : vector<1x16xf32> to vector<16xf32>
    %c1_18 = arith.constant 1 : index
    %c0_19 = arith.constant 0 : index
    %38 = vector.load %arg6[%c1_18, %c0_19] : memref<4x16xf32, #tpu.memory_space<vmem>>, vector<1x16xf32>
    %39 = vector.shape_cast %38 : vector<1x16xf32> to vector<16xf32>
    %c1_20 = arith.constant 1 : index
    %40 = memref.load %arg1[%c1_20] : memref<4xf32, #tpu.memory_space<smem>>
    %c1_21 = arith.constant 1 : index
    %41 = memref.load %arg2[%c1_21] : memref<4xf32, #tpu.memory_space<smem>>
    %42 = vector.shape_cast %37 : vector<16xf32> to vector<1x16xf32>
    %43 = vector.broadcast %42 : vector<1x16xf32> to vector<8x16xf32>
    %44 = arith.mulf %27, %43 : vector<8x16xf32>
    %cst_22 = arith.constant dense<0.000000e+00> : vector<8xf32>
    %45 = vector.multi_reduction <add>, %44, %cst_22 [1] : vector<8x16xf32> to vector<8xf32>
    %46 = vector.shape_cast %45 : vector<8xf32> to vector<8x1xf32>
    %47 = vector.broadcast %40 : f32 to vector<8x1xf32>
    %48 = arith.addf %46, %47 : vector<8x1xf32>
    %49 = math.tanh %48 : vector<8x1xf32>
    %50 = vector.shape_cast %39 : vector<16xf32> to vector<1x16xf32>
    %51 = vector.broadcast %50 : vector<1x16xf32> to vector<8x16xf32>
    %52 = vector.broadcast %49 : vector<8x1xf32> to vector<8x16xf32>
    %53 = arith.mulf %51, %52 : vector<8x16xf32>
    %54 = arith.addf %27, %53 : vector<8x16xf32>
    %55 = arith.mulf %49, %49 : vector<8x1xf32>
    %cst_23 = arith.constant 1.000000e+00 : f32
    %56 = vector.broadcast %cst_23 : f32 to vector<8x1xf32>
    %57 = arith.subf %56, %55 : vector<8x1xf32>
    %58 = vector.broadcast %41 : f32 to vector<8x1xf32>
    %59 = arith.mulf %57, %58 : vector<8x1xf32>
    %cst_24 = arith.constant 1.000000e+00 : f32
    %60 = vector.broadcast %cst_24 : f32 to vector<8x1xf32>
    %61 = arith.addf %60, %59 : vector<8x1xf32>
    %62 = arith.mulf %35, %61 : vector<8x1xf32>
    %c2 = arith.constant 2 : index
    %c0_25 = arith.constant 0 : index
    %63 = vector.load %arg5[%c2, %c0_25] : memref<4x16xf32, #tpu.memory_space<vmem>>, vector<1x16xf32>
    %64 = vector.shape_cast %63 : vector<1x16xf32> to vector<16xf32>
    %c2_26 = arith.constant 2 : index
    %c0_27 = arith.constant 0 : index
    %65 = vector.load %arg6[%c2_26, %c0_27] : memref<4x16xf32, #tpu.memory_space<vmem>>, vector<1x16xf32>
    %66 = vector.shape_cast %65 : vector<1x16xf32> to vector<16xf32>
    %c2_28 = arith.constant 2 : index
    %67 = memref.load %arg1[%c2_28] : memref<4xf32, #tpu.memory_space<smem>>
    %c2_29 = arith.constant 2 : index
    %68 = memref.load %arg2[%c2_29] : memref<4xf32, #tpu.memory_space<smem>>
    %69 = vector.shape_cast %64 : vector<16xf32> to vector<1x16xf32>
    %70 = vector.broadcast %69 : vector<1x16xf32> to vector<8x16xf32>
    %71 = arith.mulf %54, %70 : vector<8x16xf32>
    %cst_30 = arith.constant dense<0.000000e+00> : vector<8xf32>
    %72 = vector.multi_reduction <add>, %71, %cst_30 [1] : vector<8x16xf32> to vector<8xf32>
    %73 = vector.shape_cast %72 : vector<8xf32> to vector<8x1xf32>
    %74 = vector.broadcast %67 : f32 to vector<8x1xf32>
    %75 = arith.addf %73, %74 : vector<8x1xf32>
    %76 = math.tanh %75 : vector<8x1xf32>
    %77 = vector.shape_cast %66 : vector<16xf32> to vector<1x16xf32>
    %78 = vector.broadcast %77 : vector<1x16xf32> to vector<8x16xf32>
    %79 = vector.broadcast %76 : vector<8x1xf32> to vector<8x16xf32>
    %80 = arith.mulf %78, %79 : vector<8x16xf32>
    %81 = arith.addf %54, %80 : vector<8x16xf32>
    %82 = arith.mulf %76, %76 : vector<8x1xf32>
    %cst_31 = arith.constant 1.000000e+00 : f32
    %83 = vector.broadcast %cst_31 : f32 to vector<8x1xf32>
    %84 = arith.subf %83, %82 : vector<8x1xf32>
    %85 = vector.broadcast %68 : f32 to vector<8x1xf32>
    %86 = arith.mulf %84, %85 : vector<8x1xf32>
    %cst_32 = arith.constant 1.000000e+00 : f32
    %87 = vector.broadcast %cst_32 : f32 to vector<8x1xf32>
    %88 = arith.addf %87, %86 : vector<8x1xf32>
    %89 = arith.mulf %62, %88 : vector<8x1xf32>
    %c3 = arith.constant 3 : index
    %c0_33 = arith.constant 0 : index
    %90 = vector.load %arg5[%c3, %c0_33] : memref<4x16xf32, #tpu.memory_space<vmem>>, vector<1x16xf32>
    %91 = vector.shape_cast %90 : vector<1x16xf32> to vector<16xf32>
    %c3_34 = arith.constant 3 : index
    %c0_35 = arith.constant 0 : index
    %92 = vector.load %arg6[%c3_34, %c0_35] : memref<4x16xf32, #tpu.memory_space<vmem>>, vector<1x16xf32>
    %93 = vector.shape_cast %92 : vector<1x16xf32> to vector<16xf32>
    %c3_36 = arith.constant 3 : index
    %94 = memref.load %arg1[%c3_36] : memref<4xf32, #tpu.memory_space<smem>>
    %c3_37 = arith.constant 3 : index
    %95 = memref.load %arg2[%c3_37] : memref<4xf32, #tpu.memory_space<smem>>
    %96 = vector.shape_cast %91 : vector<16xf32> to vector<1x16xf32>
    %97 = vector.broadcast %96 : vector<1x16xf32> to vector<8x16xf32>
    %98 = arith.mulf %81, %97 : vector<8x16xf32>
    %cst_38 = arith.constant dense<0.000000e+00> : vector<8xf32>
    %99 = vector.multi_reduction <add>, %98, %cst_38 [1] : vector<8x16xf32> to vector<8xf32>
    %100 = vector.shape_cast %99 : vector<8xf32> to vector<8x1xf32>
    %101 = vector.broadcast %94 : f32 to vector<8x1xf32>
    %102 = arith.addf %100, %101 : vector<8x1xf32>
    %103 = math.tanh %102 : vector<8x1xf32>
    %104 = vector.shape_cast %93 : vector<16xf32> to vector<1x16xf32>
    %105 = vector.broadcast %104 : vector<1x16xf32> to vector<8x16xf32>
    %106 = vector.broadcast %103 : vector<8x1xf32> to vector<8x16xf32>
    %107 = arith.mulf %105, %106 : vector<8x16xf32>
    %108 = arith.addf %81, %107 : vector<8x16xf32>
    %109 = arith.mulf %103, %103 : vector<8x1xf32>
    %cst_39 = arith.constant 1.000000e+00 : f32
    %110 = vector.broadcast %cst_39 : f32 to vector<8x1xf32>
    %111 = arith.subf %110, %109 : vector<8x1xf32>
    %112 = vector.broadcast %95 : f32 to vector<8x1xf32>
    %113 = arith.mulf %111, %112 : vector<8x1xf32>
    %cst_40 = arith.constant 1.000000e+00 : f32
    %114 = vector.broadcast %cst_40 : f32 to vector<8x1xf32>
    %115 = arith.addf %114, %113 : vector<8x1xf32>
    %116 = arith.mulf %89, %115 : vector<8x1xf32>
    %117 = math.absf %116 : vector<8x1xf32>
    %cst_41 = arith.constant 9.99999993E-9 : f32
    %118 = vector.broadcast %cst_41 : f32 to vector<8x1xf32>
    %119 = arith.addf %117, %118 : vector<8x1xf32>
    %120 = math.log %119 : vector<8x1xf32>
    %121 = arith.truncf %108 : vector<8x16xf32> to vector<8x16xbf16>
    %c0_42 = arith.constant 0 : index
    %c0_43 = arith.constant 0 : index
    %122 = vector.load %arg7[%c0_42, %c0_43] : memref<16x64xbf16, #tpu.memory_space<vmem>>, vector<16x64xbf16>
    %cst_44 = arith.constant dense<0.000000e+00> : vector<8x64xf32>
    %123 = tpu.matmul %121, %122, %cst_44 {dimension_numbers = #tpu.dot_dimension_numbers<[1], [0], [0], [1], [0, 0, 1, 1], [], []>} : vector<8x16xbf16>, vector<16x64xbf16>, vector<8x64xf32> -> vector<8x64xf32>
    %124 = arith.addf %123, %7 : vector<8x64xf32>
    %125 = math.tanh %124 : vector<8x64xf32>
    %126 = arith.truncf %125 : vector<8x64xf32> to vector<8x64xbf16>
    %c0_45 = arith.constant 0 : index
    %c0_46 = arith.constant 0 : index
    %127 = vector.load %arg10[%c0_45, %c0_46] : memref<64x64xbf16, #tpu.memory_space<vmem>>, vector<64x64xbf16>
    %cst_47 = arith.constant dense<0.000000e+00> : vector<8x64xf32>
    %128 = tpu.matmul %126, %127, %cst_47 {dimension_numbers = #tpu.dot_dimension_numbers<[1], [0], [0], [1], [0, 0, 1, 1], [], []>} : vector<8x64xbf16>, vector<64x64xbf16>, vector<8x64xf32> -> vector<8x64xf32>
    %c0_48 = arith.constant 0 : index
    %c0_49 = arith.constant 0 : index
    %129 = vector.load %arg11[%c0_48, %c0_49] : memref<1x64xf32, #tpu.memory_space<vmem>>, vector<1x64xf32>
    %130 = vector.broadcast %129 : vector<1x64xf32> to vector<8x64xf32>
    %131 = arith.addf %128, %130 : vector<8x64xf32>
    %132 = math.tanh %131 : vector<8x64xf32>
    %133 = arith.truncf %132 : vector<8x64xf32> to vector<8x64xbf16>
    %c0_50 = arith.constant 0 : index
    %c0_51 = arith.constant 0 : index
    %134 = vector.load %arg12[%c0_50, %c0_51] : memref<64x128xbf16, #tpu.memory_space<vmem>>, vector<64x128xbf16>
    %cst_52 = arith.constant dense<0.000000e+00> : vector<8x128xf32>
    %135 = tpu.matmul %133, %134, %cst_52 {dimension_numbers = #tpu.dot_dimension_numbers<[1], [0], [0], [1], [0, 0, 1, 1], [], []>} : vector<8x64xbf16>, vector<64x128xbf16>, vector<8x128xf32> -> vector<8x128xf32>
    %c0_53 = arith.constant 0 : index
    %c0_54 = arith.constant 0 : index
    %136 = vector.load %arg13[%c0_53, %c0_54] : memref<1x128xf32, #tpu.memory_space<vmem>>, vector<1x128xf32>
    %137 = vector.broadcast %136 : vector<1x128xf32> to vector<8x128xf32>
    %138 = arith.addf %135, %137 : vector<8x128xf32>
    %c0_55 = arith.constant 0 : index
    %c0_56 = arith.constant 0 : index
    %139 = vector.load %arg14[%c0_55, %c0_56] : memref<8x128xf32, #tpu.memory_space<vmem>>, vector<8x128xf32>
    tpu.vector_store %arg14[%c0_55, %c0_56], %138 {strides = array<i32>} : memref<8x128xf32, #tpu.memory_space<vmem>>, vector<8x128xf32>,
    %140 = vector.shape_cast %120 : vector<8x1xf32> to vector<8x1xf32>
    %141 = vector.broadcast %140 : vector<8x1xf32> to vector<8x128xf32>
    %c0_57 = arith.constant 0 : index
    %c0_58 = arith.constant 0 : index
    %142 = vector.load %arg15[%c0_57, %c0_58] : memref<8x128xf32, #tpu.memory_space<vmem>>, vector<8x128xf32>
    tpu.vector_store %arg15[%c0_57, %c0_58], %141 {strides = array<i32>} : memref<8x128xf32, #tpu.memory_space<vmem>>, vector<8x128xf32>,
    return
  }
  func.func @transform_0(%arg0: i32) -> i32 {
    %c0_i32 = arith.constant 0 : i32
    %c0_i32_0 = arith.constant 0 : i32
    return %c0_i32 : i32
  }
  func.func @transform_1(%arg0: i32) -> i32 {
    %c0_i32 = arith.constant 0 : i32
    %c0_i32_0 = arith.constant 0 : i32
    return %c0_i32 : i32
  }
  func.func @transform_2(%arg0: i32) -> (i32, i32) {
    %c0_i32 = arith.constant 0 : i32
    %c0_i32_0 = arith.constant 0 : i32
    return %arg0, %c0_i32 : i32, i32
  }
  func.func @transform_3(%arg0: i32) -> (i32, i32) {
    %c0_i32 = arith.constant 0 : i32
    %c0_i32_0 = arith.constant 0 : i32
    return %arg0, %c0_i32 : i32, i32
  }
  func.func @transform_4(%arg0: i32) -> (i32, i32) {
    %c0_i32 = arith.constant 0 : i32
    %c0_i32_0 = arith.constant 0 : i32
    %c0_i32_1 = arith.constant 0 : i32
    return %c0_i32, %c0_i32_0 : i32, i32
  }
  func.func @transform_5(%arg0: i32) -> (i32, i32) {
    %c0_i32 = arith.constant 0 : i32
    %c0_i32_0 = arith.constant 0 : i32
    %c0_i32_1 = arith.constant 0 : i32
    return %c0_i32, %c0_i32_0 : i32, i32
  }
  func.func @transform_6(%arg0: i32) -> (i32, i32) {
    %c0_i32 = arith.constant 0 : i32
    %c0_i32_0 = arith.constant 0 : i32
    %c0_i32_1 = arith.constant 0 : i32
    return %c0_i32, %c0_i32_0 : i32, i32
  }
  func.func @transform_7(%arg0: i32) -> (i32, i32) {
    %c0_i32 = arith.constant 0 : i32
    %c0_i32_0 = arith.constant 0 : i32
    %c0_i32_1 = arith.constant 0 : i32
    return %c0_i32, %c0_i32_0 : i32, i32
  }
  func.func @transform_8(%arg0: i32) -> (i32, i32) {
    %c0_i32 = arith.constant 0 : i32
    %c0_i32_0 = arith.constant 0 : i32
    %c0_i32_1 = arith.constant 0 : i32
    return %c0_i32, %c0_i32_0 : i32, i32
  }
  func.func @transform_9(%arg0: i32) -> (i32, i32) {
    %c0_i32 = arith.constant 0 : i32
    %c0_i32_0 = arith.constant 0 : i32
    %c0_i32_1 = arith.constant 0 : i32
    return %c0_i32, %c0_i32_0 : i32, i32
  }
  func.func @transform_10(%arg0: i32) -> (i32, i32) {
    %c0_i32 = arith.constant 0 : i32
    %c0_i32_0 = arith.constant 0 : i32
    %c0_i32_1 = arith.constant 0 : i32
    return %c0_i32, %c0_i32_0 : i32, i32
  }
  func.func @transform_11(%arg0: i32) -> (i32, i32) {
    %c0_i32 = arith.constant 0 : i32
    %c0_i32_0 = arith.constant 0 : i32
    %c0_i32_1 = arith.constant 0 : i32
    return %c0_i32, %c0_i32_0 : i32, i32
  }
  func.func @transform_12(%arg0: i32) -> (i32, i32) {
    %c0_i32 = arith.constant 0 : i32
    %c0_i32_0 = arith.constant 0 : i32
    %c0_i32_1 = arith.constant 0 : i32
    return %c0_i32, %c0_i32_0 : i32, i32
  }
  func.func @transform_13(%arg0: i32) -> (i32, i32) {
    %c0_i32 = arith.constant 0 : i32
    %c0_i32_0 = arith.constant 0 : i32
    return %arg0, %c0_i32 : i32, i32
  }
  func.func @transform_14(%arg0: i32) -> (i32, i32) {
    %c0_i32 = arith.constant 0 : i32
    %c0_i32_0 = arith.constant 0 : i32
    return %arg0, %c0_i32 : i32, i32
  }
}

</mosaic_0001>

<llo_original>
// kernel: flow_decoder.1
$region0: #{flow_decoder.1}
  #allocation0 [shape = 'u32[]', space=smem, size = 0x4, offset = 0x4, fixed_abs, tag = 'smem constant byte address 0x4 - core index']
  #allocation1 [shape = 'u32[72,128]{1,0:T(1,128)}', space=vmem, size = 0x9000, scoped, tag = 'internal scratch']
  %s0 = inlined_call_operand.vmem [shape: f32[4], index: 0, kind: input, shape index: {}]
  %s1 = inlined_call_operand.vmem [shape: f32[4], index: 1, kind: input, shape index: {}]
  %s2 = inlined_call_operand.vmem [shape: f32[8,16], index: 2, kind: input, shape index: {}]
  %s3 = inlined_call_operand.vmem [shape: f32[8,16], index: 3, kind: input, shape index: {}]
  %s4 = inlined_call_operand.vmem [shape: f32[4,16], index: 4, kind: input, shape index: {}]
  %s5 = inlined_call_operand.vmem [shape: f32[4,16], index: 5, kind: input, shape index: {}]
  %s6 = inlined_call_operand.vmem [shape: bf16[16,64], index: 6, kind: input, shape index: {}]
  %s7 = inlined_call_operand.vmem [shape: bf16[16,64], index: 7, kind: input, shape index: {}]
  %s8 = inlined_call_operand.vmem [shape: f32[1,64], index: 8, kind: input, shape index: {}]
  %s9 = inlined_call_operand.vmem [shape: bf16[64,64], index: 9, kind: input, shape index: {}]
  %s10 = inlined_call_operand.vmem [shape: f32[1,64], index: 10, kind: input, shape index: {}]
  %s11 = inlined_call_operand.vmem [shape: bf16[64,128], index: 11, kind: input, shape index: {}]
  %s12 = inlined_call_operand.vmem [shape: f32[1,128], index: 12, kind: input, shape index: {}]
  %s13 = inlined_call_operand.hbm [shape: f32[8,128], index: 13, kind: output, shape index: {0}]
  %s14 = inlined_call_operand.vmem [shape: f32[8,128], index: 14, kind: output, shape index: {1}]
  %15 = xla_tuple %s13, %s14
  %s16 = sld [smem:[#allocation0]]
  $region78: #{flow_decoder.1} parent=0
    _
  %s18 = ssub.s32 1, %s16
  %s19 = scalar_select 0, %s18, %s16
  $region1: #{flow_decoder.1} parent=0
    #allocation2 [shape = 'u8[512]{0}', space=smem, size = 0x200, scoped, tag = 'input window, operand 0, single buffered']
    #allocation3 [shape = 's32[1]{0}', space=sflag, size = 0x4, scoped, tag = 'scoped memory for flow_decoder.1']
    #allocation4 [shape = 's32[1]{0}', space=sflag, size = 0x4, scoped, tag = 'scoped memory for flow_decoder.1']
    #allocation5 [shape = 'u8[512]{0}', space=smem, size = 0x200, scoped, tag = 'input window, operand 1, single buffered']
    #allocation6 [shape = 's32[1]{0}', space=sflag, size = 0x4, scoped, tag = 'scoped memory for flow_decoder.1']
    #allocation7 [shape = 'u8[4096]{0}', space=vmem, size = 0x1000, scoped, tag = 'output window, operand 0, single buffered']
    %20 = vsyncpa [#allocation4], 0
    %21 = vsyncpa [#allocation6], 0
    %22 = vsyncpa [#allocation3], 0
    // Predicated region
    $region2: #{flow_decoder.1} parent=1 // pred_check
      _
    $region3: #{flow_decoder.1} parent=1 // pred_check_branch
      %24 = sbr.rel (0) target = $region5
    $region4: #{flow_decoder.1} parent=1 // pred_region
      %26 = vsyncadd [#allocation4], 0
      %s28 = sshll.u32 %s0, 4
      %s29 = int_to_ptr.vmem [resolvable:$true] %s28
      %31 = dma.vmem_to_smem %s29, 16, [#allocation2], [#allocation4]
    $region5: #{flow_decoder.1} parent=1 // pred_fallthru
      _
    // Predicated region
    $region6: #{flow_decoder.1} parent=1 // pred_check
      _
    $region7: #{flow_decoder.1} parent=1 // pred_check_branch
      %33 = sbr.rel (0) target = $region9
    $region8: #{flow_decoder.1} parent=1 // pred_region
      %35 = vsyncadd [#allocation6], 0
      %s37 = sshll.u32 %s1, 4
      %s38 = int_to_ptr.vmem [resolvable:$true] %s37
      %40 = dma.vmem_to_smem %s38, 16, [#allocation5], [#allocation6]
    $region9: #{flow_decoder.1} parent=1 // pred_fallthru
      _
    // Predicated region
    $region10: #{flow_decoder.1} parent=1 // pred_check
      _
    $region11: #{flow_decoder.1} parent=1 // pred_check_branch
      %42 = sbr.rel (0) target = $region13
    $region12: #{flow_decoder.1} parent=1 // pred_region
      _
    $region13: #{flow_decoder.1} parent=1 // pred_fallthru
      _
    // Predicated region
    $region14: #{flow_decoder.1} parent=1 // pred_check
      _
    $region15: #{flow_decoder.1} parent=1 // pred_check_branch
      %44 = sbr.rel (0) target = $region17
    $region16: #{flow_decoder.1} parent=1 // pred_region
      _
    $region17: #{flow_decoder.1} parent=1 // pred_fallthru
      _
    // Predicated region
    $region18: #{flow_decoder.1} parent=1 // pred_check
      _
    $region19: #{flow_decoder.1} parent=1 // pred_check_branch
      %46 = sbr.rel (0) target = $region21
    $region20: #{flow_decoder.1} parent=1 // pred_region
      _
    $region21: #{flow_decoder.1} parent=1 // pred_fallthru
      _
    // Predicated region
    $region22: #{flow_decoder.1} parent=1 // pred_check
      _
    $region23: #{flow_decoder.1} parent=1 // pred_check_branch
      %48 = sbr.rel (0) target = $region25
    $region24: #{flow_decoder.1} parent=1 // pred_region
      _
    $region25: #{flow_decoder.1} parent=1 // pred_fallthru
      _
    // Predicated region
    $region26: #{flow_decoder.1} parent=1 // pred_check
      _
    $region27: #{flow_decoder.1} parent=1 // pred_check_branch
      %50 = sbr.rel (0) target = $region29
    $region28: #{flow_decoder.1} parent=1 // pred_region
      _
    $region29: #{flow_decoder.1} parent=1 // pred_fallthru
      _
    // Predicated region
    $region30: #{flow_decoder.1} parent=1 // pred_check
      _
    $region31: #{flow_decoder.1} parent=1 // pred_check_branch
      %52 = sbr.rel (0) target = $region33
    $region32: #{flow_decoder.1} parent=1 // pred_region
      _
    $region33: #{flow_decoder.1} parent=1 // pred_fallthru
      _
    // Predicated region
    $region34: #{flow_decoder.1} parent=1 // pred_check
      _
    $region35: #{flow_decoder.1} parent=1 // pred_check_branch
      %54 = sbr.rel (0) target = $region37
    $region36: #{flow_decoder.1} parent=1 // pred_region
      _
    $region37: #{flow_decoder.1} parent=1 // pred_fallthru
      _
    // Predicated region
    $region38: #{flow_decoder.1} parent=1 // pred_check
      _
    $region39: #{flow_decoder.1} parent=1 // pred_check_branch
      %56 = sbr.rel (0) target = $region41
    $region40: #{flow_decoder.1} parent=1 // pred_region
      _
    $region41: #{flow_decoder.1} parent=1 // pred_fallthru
      _
    // Predicated region
    $region42: #{flow_decoder.1} parent=1 // pred_check
      _
    $region43: #{flow_decoder.1} parent=1 // pred_check_branch
      %58 = sbr.rel (0) target = $region45
    $region44: #{flow_decoder.1} parent=1 // pred_region
      _
    $region45: #{flow_decoder.1} parent=1 // pred_fallthru
      _
    // Predicated region
    $region46: #{flow_decoder.1} parent=1 // pred_check
      _
    $region47: #{flow_decoder.1} parent=1 // pred_check_branch
      %60 = sbr.rel (0) target = $region49
    $region48: #{flow_decoder.1} parent=1 // pred_region
      _
    $region49: #{flow_decoder.1} parent=1 // pred_fallthru
      _
    // Predicated region
    $region50: #{flow_decoder.1} parent=1 // pred_check
      _
    $region51: #{flow_decoder.1} parent=1 // pred_check_branch
      %62 = sbr.rel (0) target = $region53
    $region52: #{flow_decoder.1} parent=1 // pred_region
      _
    $region53: #{flow_decoder.1} parent=1 // pred_fallthru
      _
    // Predicated region
    $region54: #{flow_decoder.1} parent=1 // pred_check
      _
    $region55: #{flow_decoder.1} parent=1 // pred_check_branch
      %64 = sbr.rel (0) target = $region57
    $region56: #{flow_decoder.1} parent=1 // pred_region
      %66 = dma.done [#allocation4], 16
    $region57: #{flow_decoder.1} parent=1 // pred_fallthru
      _
    // Predicated region
    $region58: #{flow_decoder.1} parent=1 // pred_check
      _
    $region59: #{flow_decoder.1} parent=1 // pred_check_branch
      %68 = sbr.rel (0) target = $region61
    $region60: #{flow_decoder.1} parent=1 // pred_region
      %70 = dma.done [#allocation6], 16
    $region61: #{flow_decoder.1} parent=1 // pred_fallthru
      _
    %71 = sfence
    %v73 = vld [vmem:[%s2] sm:$0xff]
    %v74 = vld [vmem:[%s3] sm:$0xff]
    %v75 = vpack.c.bf16 %v74, %v74
    %v76 = vld [vmem:[%s7] sm:$0xf]
    %v77 = vld [vmem:[%s7 + $0x4] sm:$0xf]
    %v78 = vld [vmem:[%s8] sm:$0x1]
    %v80 = vperm.slane %v78, 0
    %v84 = vunpack.c.l.b16 %v76
    %v85 = vunpack.c.l.b16 %v77
    %v86 = vpack.c.b16 %v85, %v84
    %vm88 = vcmask 130048
    %v90 = vsel %vm88, %v75, 0
    %92 = vmatpush.bf16.msra.mxu0 0
    %93 = vmatpush.bf16.msra.mxu0 0
    %94 = vmatpush.bf16.msra.mxu0 0
    %95 = vmatpush.bf16.msra.mxu0 0
    %96 = vmatpush.bf16.msra.mxu0 0
    %97 = vmatpush.bf16.msra.mxu0 0
    %98 = vmatpush.bf16.msra.mxu0 0
    %99 = vmatpush.bf16.msra.mxu0 %v86
    %100 = vmatmul.bf16.gmra.mxu0 %v90
    %v101 = vpop.f32.mrf.mxu0
    %v102 = vadd.f32 %v80, %v101
    %v103 = vpop.f32.mrf.mxu0
    %104 = vdwg.mxu0
    %v105 = vld [vmem:[%s4] sm:$0x1]
    %v106 = vld [vmem:[%s5] sm:$0x1]
    %s107 = sld [smem:[#allocation2]]
    %s108 = sld [smem:[#allocation5]]
    %v109 = vperm.slane %v105, 0
    %v110 = vmul.f32 %v73, %v109
    %v111 = vsel %vm88, %v110, 0.0
    %112 = vadd.xlane.f32.xlu0 %v111
    %v113 = vpop.xlane.xlu0 %112
    %v114 = vstv %s107
    %v115 = vadd.f32 %v113, %v114
    %v116 = vtanh.pop %v115
    %v117 = vperm.slane %v106, 0
    %v118 = vmul.f32 %v117, %v116
    %v119 = vadd.f32 %v73, %v118
    %v120 = vmul.f32 %v116, %v116
    %v121 = vsub.f32 1.0, %v120
    %v122 = vstv %s108
    %v123 = vmul.f32 %v121, %v122
    %v124 = vadd.f32 %v123, 1.0
    %v125 = vld [vmem:[%s4 + $0x1] sm:$0x1]
    %v126 = vld [vmem:[%s5 + $0x1] sm:$0x1]
    %s127 = sld [smem:[#allocation2 + $0x1]]
    %s128 = sld [smem:[#allocation5 + $0x1]]
    %v129 = vperm.slane %v125, 0
    %v130 = vmul.f32 %v119, %v129
    %v131 = vsel %vm88, %v130, 0.0
    %132 = vadd.xlane.f32.xlu0 %v131
    %v133 = vpop.xlane.xlu0 %132
    %v134 = vstv %s127
    %v135 = vadd.f32 %v133, %v134
    %v136 = vtanh.pop %v135
    %v137 = vperm.slane %v126, 0
    %v138 = vmul.f32 %v137, %v136
    %v139 = vadd.f32 %v119, %v138
    %v140 = vmul.f32 %v136, %v136
    %v141 = vsub.f32 1.0, %v140
    %v142 = vstv %s128
    %v143 = vmul.f32 %v141, %v142
    %v144 = vadd.f32 %v143, 1.0
    %v145 = vmul.f32 %v124, %v144
    %v146 = vld [vmem:[%s4 + $0x2] sm:$0x1]
    %v147 = vld [vmem:[%s5 + $0x2] sm:$0x1]
    %s148 = sld [smem:[#allocation2 + $0x2]]
    %s149 = sld [smem:[#allocation5 + $0x2]]
    %v150 = vperm.slane %v146, 0
    %v151 = vmul.f32 %v139, %v150
    %v152 = vsel %vm88, %v151, 0.0
    %153 = vadd.xlane.f32.xlu0 %v152
    %v154 = vpop.xlane.xlu0 %153
    %v155 = vstv %s148
    %v156 = vadd.f32 %v154, %v155
    %v157 = vtanh.pop %v156
    %v158 = vperm.slane %v147, 0
    %v159 = vmul.f32 %v158, %v157
    %v160 = vadd.f32 %v139, %v159
    %v161 = vmul.f32 %v157, %v157
    %v162 = vsub.f32 1.0, %v161
    %v163 = vstv %s149
    %v164 = vmul.f32 %v162, %v163
    %v165 = vadd.f32 %v164, 1.0
    %v166 = vmul.f32 %v145, %v165
    %v167 = vld [vmem:[%s4 + $0x3] sm:$0x1]
    %v168 = vld [vmem:[%s5 + $0x3] sm:$0x1]
    %s169 = sld [smem:[#allocation2 + $0x3]]
    %s170 = sld [smem:[#allocation5 + $0x3]]
    %v171 = vperm.slane %v167, 0
    %v172 = vmul.f32 %v160, %v171
    %v173 = vsel %vm88, %v172, 0.0
    %174 = vadd.xlane.f32.xlu0 %v173
    %v175 = vpop.xlane.xlu0 %174
    %v176 = vstv %s169
    %v177 = vadd.f32 %v175, %v176
    %v178 = vtanh.pop %v177
    %v179 = vperm.slane %v168, 0
    %v180 = vmul.f32 %v179, %v178
    %v181 = vadd.f32 %v160, %v180
    %v182 = vmul.f32 %v178, %v178
    %v183 = vsub.f32 1.0, %v182
    %v184 = vstv %s170
    %v185 = vmul.f32 %v183, %v184
    %v186 = vadd.f32 %v185, 1.0
    %v187 = vmul.f32 %v166, %v186
    %v188 = vand.u32 2147483647, %v187
    %v189 = vadd.f32 %v188, 1e-08
    %v190 = vlog2.pop %v189
    %v191 = vmul.f32 %v190, 0.6931472
    %v192 = vpack.c.bf16 %v181, %v181
    %v193 = vld [vmem:[%s6] sm:$0xf]
    %v194 = vld [vmem:[%s6 + $0x4] sm:$0xf]
    %v197 = vunpack.c.l.b16 %v193
    %v198 = vunpack.c.l.b16 %v194
    %v199 = vpack.c.b16 %v198, %v197
    %v202 = vsel %vm88, %v192, 0
    %204 = vmatpush.bf16.msra.mxu0 0
    %205 = vmatpush.bf16.msra.mxu0 0
    %206 = vmatpush.bf16.msra.mxu0 0
    %207 = vmatpush.bf16.msra.mxu0 0
    %208 = vmatpush.bf16.msra.mxu0 0
    %209 = vmatpush.bf16.msra.mxu0 0
    %210 = vmatpush.bf16.msra.mxu0 0
    %211 = vmatpush.bf16.msra.mxu0 %v199
    %212 = vmatmul.bf16.gmra.mxu0 %v202
    %v213 = vpop.f32.mrf.mxu0
    %v214 = vadd.f32 %v102, %v213
    %v215 = vpop.f32.mrf.mxu0
    %216 = vdwg.mxu0
    %v217 = vtanh.pop %v214
    %v218 = vpack.c.bf16 %v217, %v217
    %v219 = vld [vmem:[%s9] sm:$0xf]
    %v220 = vld [vmem:[%s9 + $0x4] sm:$0xf]
    %v221 = vld [vmem:[%s9 + $0x8] sm:$0xf]
    %v222 = vld [vmem:[%s9 + $0xc] sm:$0xf]
    %v223 = vld [vmem:[%s9 + $0x10] sm:$0xf]
    %v224 = vld [vmem:[%s9 + $0x14] sm:$0xf]
    %v225 = vld [vmem:[%s9 + $0x18] sm:$0xf]
    %v226 = vld [vmem:[%s9 + $0x1c] sm:$0xf]
    %v227 = vld [vmem:[%s10] sm:$0x1]
    %v229 = vperm.slane %v227, 0
    %v239 = vunpack.c.l.b16 %v219
    %v240 = vunpack.c.l.b16 %v220
    %v241 = vunpack.c.l.b16 %v221
    %v242 = vunpack.c.l.b16 %v222
    %v243 = vunpack.c.l.b16 %v223
    %v244 = vunpack.c.l.b16 %v224
    %v245 = vunpack.c.l.b16 %v225
    %v246 = vunpack.c.l.b16 %v226
    %v247 = vpack.c.b16 %v240, %v239
    %v248 = vpack.c.b16 %v242, %v241
    %v249 = vpack.c.b16 %v244, %v243
    %v250 = vpack.c.b16 %v246, %v245
    %vm255 = vcmask 523264
    %v257 = vsel %vm255, %v218, 0
    %259 = vmatpush.bf16.msra.mxu0 0
    %260 = vmatpush.bf16.msra.mxu0 0
    %261 = vmatpush.bf16.msra.mxu0 0
    %262 = vmatpush.bf16.msra.mxu0 0
    %263 = vmatpush.bf16.msra.mxu0 %v250
    %264 = vmatpush.bf16.msra.mxu0 %v249
    %265 = vmatpush.bf16.msra.mxu0 %v248
    %266 = vmatpush.bf16.msra.mxu0 %v247
    %267 = vmatmul.bf16.gmra.mxu0 %v257
    %v268 = vpop.f32.mrf.mxu0
    %v269 = vadd.f32 %v229, %v268
    %v270 = vpop.f32.mrf.mxu0
    %271 = vdwg.mxu0
    %v272 = vtanh.pop %v269
    %v273 = vpack.c.bf16 %v272, %v272
    %v274 = vld [vmem:[%s11] sm:$0xf]
    %v275 = vld [vmem:[%s11 + $0x4] sm:$0xf]
    %v276 = vld [vmem:[%s11 + $0x8] sm:$0xf]
    %v277 = vld [vmem:[%s11 + $0xc] sm:$0xf]
    %v278 = vld [vmem:[%s11 + $0x10] sm:$0xf]
    %v279 = vld [vmem:[%s11 + $0x14] sm:$0xf]
    %v280 = vld [vmem:[%s11 + $0x18] sm:$0xf]
    %v281 = vld [vmem:[%s11 + $0x1c] sm:$0xf]
    %v282 = vld [vmem:[%s12] sm:$0x1]
    %v284 = vperm.slane %v282, 0
    %v294 = vunpack.c.l.b16 %v274
    %v295 = vunpack.c.l.b16 %v275
    %v296 = vunpack.c.l.b16 %v276
    %v297 = vunpack.c.l.b16 %v277
    %v298 = vunpack.c.l.b16 %v278
    %v299 = vunpack.c.l.b16 %v279
    %v300 = vunpack.c.l.b16 %v280
    %v301 = vunpack.c.l.b16 %v281
    %v302 = vpack.c.b16 %v295, %v294
    %v303 = vpack.c.b16 %v297, %v296
    %v304 = vpack.c.b16 %v299, %v298
    %v305 = vpack.c.b16 %v301, %v300
    %v311 = vsel %vm255, %v273, 0
    %313 = vmatpush.bf16.msra.mxu0 0
    %314 = vmatpush.bf16.msra.mxu0 0
    %315 = vmatpush.bf16.msra.mxu0 0
    %316 = vmatpush.bf16.msra.mxu0 0
    %317 = vmatpush.bf16.msra.mxu0 %v305
    %318 = vmatpush.bf16.msra.mxu0 %v304
    %319 = vmatpush.bf16.msra.mxu0 %v303
    %320 = vmatpush.bf16.msra.mxu0 %v302
    %321 = vmatmul.bf16.gmra.mxu0 %v311
    %v322 = vpop.f32.mrf.mxu0
    %v323 = vadd.f32 %v284, %v322
    %v324 = vpop.f32.mrf.mxu0
    %325 = vdwg.mxu0
    %326 = vst [vmem:[#allocation7] sm:$0xff] %v323
    %327 = vst [vmem:[%s14] sm:$0xff] %v191
    // Predicated region
    $region62: #{flow_decoder.1} parent=1 // pred_check
      _
    $region63: #{flow_decoder.1} parent=1 // pred_check_branch
      %329 = sbr.rel (0) target = $region65
    $region64: #{flow_decoder.1} parent=1 // pred_region
      %331 = vsyncadd [#allocation3], 0
      %s333 = sshll.u32 [#allocation7], 4
      %s334 = int_to_ptr.vmem [resolvable:$true] %s333
      %s335 = sshll.u32 %s13, 4
      %s336 = int_to_ptr.hbm [resolvable:$true] %s335
      %338 = dma.vmem_to_hbm [thread:$0]  %s334, 128, %s336, [#allocation3]
    $region65: #{flow_decoder.1} parent=1 // pred_fallthru
      _
    // Predicated region
    $region66: #{flow_decoder.1} parent=1 // pred_check
      _
    $region67: #{flow_decoder.1} parent=1 // pred_check_branch
      %340 = sbr.rel (0) target = $region69
    $region68: #{flow_decoder.1} parent=1 // pred_region
      _
    $region69: #{flow_decoder.1} parent=1 // pred_fallthru
      _
    // Predicated region
    $region70: #{flow_decoder.1} parent=1 // pred_check
      _
    $region71: #{flow_decoder.1} parent=1 // pred_check_branch
      %342 = sbr.rel (0) target = $region73
    $region72: #{flow_decoder.1} parent=1 // pred_region
      %344 = dma.done [#allocation3], 128
    $region73: #{flow_decoder.1} parent=1 // pred_fallthru
      _
    // Predicated region
    $region74: #{flow_decoder.1} parent=1 // pred_check
      _
    $region75: #{flow_decoder.1} parent=1 // pred_check_branch
      %346 = sbr.rel (0) target = $region77
    $region76: #{flow_decoder.1} parent=1 // pred_region
      _
    $region77: #{flow_decoder.1} parent=1 // pred_fallthru
      _
    %347 = vsyncpa [#allocation3], 1
    %348 = vsyncpa [#allocation4], 1
    %349 = vsyncpa [#allocation6], 1

</llo_original>
